<compile_context>
chip_gen: v7x
topology: tpu7x:2x2x1
jax: 0.10.0
libtpu: 0.0.40
codegen_flags: <defaults>
</compile_context>

<pallas_src>
import jax
import jax.numpy as jnp
from jax import lax
from jax.experimental import pallas as pl
from jax.experimental.pallas import tpu as pltpu


def gat_gate_kernel(x_ref, adj_ref, ww_ref, wb_ref, asym_ref, gw_ref, gb_ref,
                    out_ref):
    bt, n, din = x_ref.shape
    dout = ww_ref.shape[0]

    x_bf = x_ref[...]                          # (Bt, N, Din)  bf16
    adj = adj_ref[...].astype(jnp.float32)     # (Bt, N, N)    bf16 -> f32
    ww = ww_ref[...]                           # (Dout, Din)   bf16 (nn.Linear W)
    wb = wb_ref[...]                           # (1, Dout)     f32  (nn.Linear b)
    asym = asym_ref[...]                       # (Dout, Dout)  bf16 (A + A^T)
    gw = gw_ref[...]                           # (1, 2*Dout)   f32  (gate weight)
    gb = gb_ref[...]                           # (1, 1)        f32  (gate bias)

    # ---- h = x @ W^T + b  (bf16 MXU operands, fp32 accumulation) ----
    x2 = x_bf.reshape(bt * n, din)                                      # bf16
    h2 = lax.dot_general(x2, ww, (((1,), (1,)), ((), ())),
                         preferred_element_type=jnp.float32) + wb       # (Bt*N, Dout) f32
    h2b = h2.astype(jnp.bfloat16)              # single bf16 copy of h, reused below

    # ---- e = h (A + A^T) h^T   (e + e^T folded; one (N,N) matmul per graph) ----
    ha2 = lax.dot_general(h2b, asym, (((1,), (0,)), ((), ())),
                          preferred_element_type=jnp.float32)           # (Bt*N, Dout) f32
    hb = h2b.reshape(bt, n, dout)              # reuse bf16 h (no second cast pass)
    hab = ha2.astype(jnp.bfloat16).reshape(bt, n, dout)
    e = jnp.einsum('bjd,bkd->bjk', hab, hb,
                   preferred_element_type=jnp.float32)                  # (Bt, N, N) f32

    # ---- masked softmax over dim 1 (matches F.softmax(attention, dim=1)) ----
    att = jnp.where(adj > 0.0, e, jnp.full_like(e, -9.0e15))
    att = att - jnp.max(att, axis=1, keepdims=True)
    att = jnp.exp(att)
    att = att * pl.reciprocal(jnp.sum(att, axis=1, keepdims=True), approx=True)
    att = att * adj

    # ---- h' = relu(attention @ h) ----
    h_prime = jnp.maximum(
        jnp.einsum('bjk,bkd->bjd', att.astype(jnp.bfloat16), hb,
                   preferred_element_type=jnp.float32),
        0.0)                                                            # (Bt, N, Dout) f32

    # ---- gate(cat([x, h'], -1)) as one fused VPU mul + single lane reduction ----
    x_f32 = x_bf.astype(jnp.float32)
    gw_x = gw[:, :dout]                        # (1, Dout)
    gw_h = gw[:, dout:]                        # (1, Dout)
    logits = jnp.sum(x_f32 * gw_x + h_prime * gw_h,
                     axis=-1, keepdims=True) + gb                       # (Bt, N, 1)
    coeff = jax.nn.sigmoid(logits)

    # TODO(synk): when Dout < 128 a lane-dense (Bt, N*Dout) output slab would
    # avoid masked partial stores, but the minor-dim merge is a risky in-kernel
    # relayout, so the natural (Bt, N, Dout) layout is kept.
    out_ref[...] = coeff * x_f32 + (1.0 - coeff) * h_prime


# ---------------------------------------------------------------------------
# Tiling policy helpers (generation- and padding-aware).
# ---------------------------------------------------------------------------

def _round_up(v, m):
    return ((v + m - 1) // m) * m


def _padded_bytes(shape, itemsize):
    """VMEM bytes for a tensor once its last two dims are padded to the native
    (sublane, 128) tile (sublanes scale with packing: 8 for f32, 16 for bf16)."""
    shape = tuple(shape)
    if len(shape) == 0:
        shape = (1, 1)
    elif len(shape) == 1:
        shape = (1,) + shape
    sublanes = 8 * max(1, 4 // itemsize)
    lead = 1
    for d in shape[:-2]:
        lead *= int(d)
    rows = _round_up(int(shape[-2]), sublanes)
    cols = _round_up(int(shape[-1]), 128)
    return lead * rows * cols * itemsize


def _vmem_bytes(bt, n, din, dout):
    """Padding-aware per-step VMEM working-set estimate."""
    bf16, f32 = 2, 4
    # Double-buffered pipeline blocks (inputs + output).
    io = 2 * (_padded_bytes((bt, n, din), bf16)        # x  (bf16)
              + _padded_bytes((bt, n, n), bf16)        # adj (bf16)
              + _padded_bytes((bt, n, dout), f32))     # out (f32)
    params = 2 * (_padded_bytes((dout, din), bf16)
                  + _padded_bytes((1, dout), f32)
                  + _padded_bytes((dout, dout), bf16)
                  + _padded_bytes((1, 2 * dout), f32)
                  + _padded_bytes((1, 1), f32))
    # In-kernel temporaries: h/hA/h'/x in f32, bf16 copies, e/att in f32.
    temps = (4 * _padded_bytes((bt * n, dout), f32)
             + 2 * _padded_bytes((bt * n, dout), bf16)
             + 2 * _padded_bytes((bt, n, n), f32)
             + 1 * _padded_bytes((bt, n, n), bf16)
             + _padded_bytes((bt, n, din), f32))
    return io + params + temps


def _vmem_capacity_bytes():
    """Physical VMEM per core; conservative 64 MiB fallback (valid on v7x)."""
    try:
        info = pltpu.get_tpu_info()
        for name in ("vmem_capacity_bytes", "vmem_size_bytes", "vmem_bytes"):
            cap = getattr(info, name, None)
            if cap:
                return int(cap)
    except Exception:
        pass
    return 64 * 2**20


def _pick_block_b(b, n, din, dout, budget_bytes, min_grid_steps=2):
    """Largest divisor of B whose padded working set fits the budget, keeping
    at least `min_grid_steps` grid steps (feeds both v7x TensorCores) and
    preferring an MXU-aligned flattened M (block_b*N % 256, else % 128)."""
    cap = b if b < min_grid_steps else b // min_grid_steps
    cap = max(1, cap)
    fits = [bt for bt in range(1, cap + 1)
            if b % bt == 0 and _vmem_bytes(bt, n, din, dout) <= budget_bytes]
    if not fits:
        return 1
    best = max(fits)
    for align in (256, 128):
        aligned = [bt for bt in fits if (bt * n) % align == 0]
        if aligned and 2 * max(aligned) >= best:
            return max(aligned)
    return best


# ---------------------------------------------------------------------------
# Wrapper
# ---------------------------------------------------------------------------

def gat_gate(x, adj, ww, wb, a, gw, gb, *, block_b=None, vmem_limit_bytes=None):
    B, N, Din = x.shape
    Dout = ww.shape[0]
    assert Din == Dout, "GAT_gate residual gating requires n_in == n_out"
    assert adj.shape == (B, N, N)

    # Fold the e + e^T symmetrization into the attention bilinear form.
    a_sym = (a + a.T).astype(jnp.bfloat16)
    ww_b = ww.astype(jnp.bfloat16)
    wb2 = wb.reshape(1, Dout).astype(jnp.float32)
    gw2 = gw.reshape(1, 2 * Dout).astype(jnp.float32)
    gb2 = gb.reshape(1, 1).astype(jnp.float32)
    # Shrink the dominant HBM streams: x and adj travel as bf16; the kernel
    # upcasts to fp32 where precision matters (softmax, gating, residual).
    x_b = x.astype(jnp.bfloat16)
    adj_b = adj.astype(jnp.bfloat16)

    vmem_cap = _vmem_capacity_bytes()

    if block_b is None:
        block_b = _pick_block_b(B, N, Din, Dout,
                                budget_bytes=int(0.70 * vmem_cap))
    assert B % block_b == 0, "block_b must divide the batch size"

    if vmem_limit_bytes is None:
        est = _vmem_bytes(block_b, N, Din, Dout)
        limit_cap = int(0.82 * vmem_cap)   # leave internal-scratch headroom
        vmem_limit_bytes = min(limit_cap, max(32 * 2**20, 2 * est))

    grid = (B // block_b,)

    out = pl.pallas_call(
        gat_gate_kernel,
        out_shape=jax.ShapeDtypeStruct((B, N, Dout), jnp.float32),
        grid_spec=pltpu.PrefetchScalarGridSpec(
            num_scalar_prefetch=0,
            grid=grid,
            in_specs=[
                pl.BlockSpec((block_b, N, Din), lambda b: (b, 0, 0)),   # x (bf16)
                pl.BlockSpec((block_b, N, N), lambda b: (b, 0, 0)),     # adj (bf16)
                pl.BlockSpec((Dout, Din), lambda b: (0, 0)),            # W weight (bf16)
                pl.BlockSpec((1, Dout), lambda b: (0, 0)),              # W bias
                pl.BlockSpec((Dout, Dout), lambda b: (0, 0)),           # A + A^T (bf16)
                pl.BlockSpec((1, 2 * Dout), lambda b: (0, 0)),          # gate weight
                pl.BlockSpec((1, 1), lambda b: (0, 0)),                 # gate bias
            ],
            out_specs=pl.BlockSpec((block_b, N, Dout), lambda b: (b, 0, 0)),
        ),
        compiler_params=pltpu.CompilerParams(
            dimension_semantics=("parallel",),
            vmem_limit_bytes=int(vmem_limit_bytes)),
    )(x_b, adj_b, ww_b, wb2, a_sym, gw2, gb2)
    return out


def gat_gate_reference(x, adj, ww, wb, a, gw, gb):
    """Pure-JAX fp32 mirror of the PyTorch forward, for verification."""
    h = jnp.einsum('bnd,od->bno', x, ww) + wb
    e = jnp.einsum('bjl,bkl->bjk', jnp.einsum('bnd,de->bne', h, a), h)
    e = e + jnp.transpose(e, (0, 2, 1))
    att = jnp.where(adj > 0, e, jnp.full_like(e, -9.0e15))
    att = jax.nn.softmax(att, axis=1)
    att = att * adj
    h_prime = jax.nn.relu(jnp.einsum('bij,bjk->bik', att, h))
    cat = jnp.concatenate([x, h_prime], axis=-1)
    coeff = jax.nn.sigmoid(jnp.einsum('bnd,od->bno', cat, gw) + gb)
    return coeff * x + (1.0 - coeff) * h_prime


if __name__ == "__main__":
    B, N, D = 2, 8, 32  # batch, nodes, feature dim (n_in == n_out == D)

    key = jax.random.PRNGKey(0)
    kx, kadj, kw, kwb, ka, kg, kgb = jax.random.split(key, 7)

    x = jax.random.normal(kx, (B, N, D), dtype=jnp.float32)
    adj = (jax.random.uniform(kadj, (B, N, N)) > 0.5).astype(jnp.float32)
    adj = jnp.maximum(adj, jnp.eye(N, dtype=jnp.float32)[None])  # self loops

    # Parameter shapes mirror the module: W: Linear(D, D), A: (D, D),
    # gate: Linear(2D, 1). (A is zero-initialized in the module; random values
    # are used here to exercise the full compute path.)
    ww = jax.random.normal(kw, (D, D), dtype=jnp.float32) * 0.1
    wb = jax.random.normal(kwb, (D,), dtype=jnp.float32) * 0.1
    a = jax.random.normal(ka, (D, D), dtype=jnp.float32) * 0.1
    gw = jax.random.normal(kg, (1, 2 * D), dtype=jnp.float32) * 0.1
    gb = jax.random.normal(kgb, (1,), dtype=jnp.float32) * 0.1

    out = gat_gate(x, adj, ww, wb, a, gw, gb)
    out = jax.block_until_ready(out)

    ref = gat_gate_reference(x, adj, ww, wb, a, gw, gb)
    assert out.shape == (B, N, D)
    # Tolerance loosened vs the fp32 reference because the kernel streams
    # x/adj as bf16 and runs its matmuls with bf16 operands (fp32 accumulation).
    assert jnp.allclose(out, ref, rtol=5e-2, atol=5e-2), "mismatch vs reference"

    print("KERNEL_OK")
</pallas_src>

<mosaic_0001>
module attributes {stable_mosaic.version = 11 : i64} {
  func.func @gat_gate_kernel(%arg0: i32, %arg1: memref<1x8x32xbf16, #tpu.memory_space<vmem>>, %arg2: memref<1x8x8xbf16, #tpu.memory_space<vmem>>, %arg3: memref<32x32xbf16, #tpu.memory_space<vmem>>, %arg4: memref<1x32xf32, #tpu.memory_space<vmem>>, %arg5: memref<32x32xbf16, #tpu.memory_space<vmem>>, %arg6: memref<1x64xf32, #tpu.memory_space<vmem>>, %arg7: memref<1x1xf32, #tpu.memory_space<vmem>>, %arg8: memref<1x8x32xf32, #tpu.memory_space<vmem>>) attributes {dimension_semantics = [#tpu.dimension_semantics<parallel>], iteration_bounds = array<i64: 2>, scalar_prefetch = 0 : i64, scratch_operands = 0 : i64, tpu.core_type = #tpu.core_type<tc>, window_params = [{transform_indices = @transform_0, window_bounds = array<i64: 1, 8, 32>}, {transform_indices = @transform_1, window_bounds = array<i64: 1, 8, 8>}, {pipeline_mode = #tpu.pipeline_mode<synchronous>, transform_indices = @transform_2, window_bounds = array<i64: 32, 32>}, {pipeline_mode = #tpu.pipeline_mode<synchronous>, transform_indices = @transform_3, window_bounds = array<i64: 1, 32>}, {pipeline_mode = #tpu.pipeline_mode<synchronous>, transform_indices = @transform_4, window_bounds = array<i64: 32, 32>}, {pipeline_mode = #tpu.pipeline_mode<synchronous>, transform_indices = @transform_5, window_bounds = array<i64: 1, 64>}, {pipeline_mode = #tpu.pipeline_mode<synchronous>, transform_indices = @transform_6, window_bounds = array<i64: 1, 1>}, {transform_indices = @transform_7, window_bounds = array<i64: 1, 8, 32>}]} {
    %c0 = arith.constant 0 : index
    %c0_0 = arith.constant 0 : index
    %c0_1 = arith.constant 0 : index
    %0 = vector.load %arg1[%c0, %c0_0, %c0_1] : memref<1x8x32xbf16, #tpu.memory_space<vmem>>, vector<1x8x32xbf16>
    %c0_2 = arith.constant 0 : index
    %c0_3 = arith.constant 0 : index
    %c0_4 = arith.constant 0 : index
    %1 = vector.load %arg2[%c0_2, %c0_3, %c0_4] : memref<1x8x8xbf16, #tpu.memory_space<vmem>>, vector<1x8x8xbf16>
    %2 = arith.extf %1 : vector<1x8x8xbf16> to vector<1x8x8xf32>
    %c0_5 = arith.constant 0 : index
    %c0_6 = arith.constant 0 : index
    %3 = vector.load %arg3[%c0_5, %c0_6] : memref<32x32xbf16, #tpu.memory_space<vmem>>, vector<32x32xbf16>
    %c0_7 = arith.constant 0 : index
    %c0_8 = arith.constant 0 : index
    %4 = vector.load %arg4[%c0_7, %c0_8] : memref<1x32xf32, #tpu.memory_space<vmem>>, vector<1x32xf32>
    %c0_9 = arith.constant 0 : index
    %c0_10 = arith.constant 0 : index
    %5 = vector.load %arg5[%c0_9, %c0_10] : memref<32x32xbf16, #tpu.memory_space<vmem>>, vector<32x32xbf16>
    %c0_11 = arith.constant 0 : index
    %c0_12 = arith.constant 0 : index
    %6 = vector.load %arg6[%c0_11, %c0_12] : memref<1x64xf32, #tpu.memory_space<vmem>>, vector<1x64xf32>
    %c0_13 = arith.constant 0 : index
    %c0_14 = arith.constant 0 : index
    %7 = vector.load %arg7[%c0_13, %c0_14] : memref<1x1xf32, #tpu.memory_space<vmem>>, vector<1x1xf32>
    %8 = vector.shape_cast %0 : vector<1x8x32xbf16> to vector<8x32xbf16>
    %cst = arith.constant dense<0.000000e+00> : vector<8x32xf32>
    %9 = tpu.matmul %8, %3, %cst {dimension_numbers = #tpu.dot_dimension_numbers<[1], [1], [0], [0], [0, 0, 1, 0], [], []>} : vector<8x32xbf16>, vector<32x32xbf16>, vector<8x32xf32> -> vector<8x32xf32>
    %10 = vector.broadcast %4 : vector<1x32xf32> to vector<8x32xf32>
    %11 = arith.addf %9, %10 : vector<8x32xf32>
    %12 = arith.truncf %11 : vector<8x32xf32> to vector<8x32xbf16>
    %cst_15 = arith.constant dense<0.000000e+00> : vector<8x32xf32>
    %13 = tpu.matmul %12, %5, %cst_15 {dimension_numbers = #tpu.dot_dimension_numbers<[1], [0], [0], [1], [0, 0, 1, 1], [], []>} : vector<8x32xbf16>, vector<32x32xbf16>, vector<8x32xf32> -> vector<8x32xf32>
    %14 = vector.shape_cast %12 : vector<8x32xbf16> to vector<1x8x32xbf16>
    %15 = arith.truncf %13 : vector<8x32xf32> to vector<8x32xbf16>
    %16 = vector.shape_cast %15 : vector<8x32xbf16> to vector<1x8x32xbf16>
    "tpu.trace_start"() <{level = 10 : i32, message = "bjd,bkd->bjk"}> : () -> ()
    %cst_16 = arith.constant dense<0.000000e+00> : vector<1x8x8xf32>
    %17 = tpu.matmul %16, %14, %cst_16 {dimension_numbers = #tpu.dot_dimension_numbers<[2], [2], [1], [1], [0, 0, 0, 1, 1, 1], [0], [0]>} : vector<1x8x32xbf16>, vector<1x8x32xbf16>, vector<1x8x8xf32> -> vector<1x8x8xf32>
    %cst_17 = arith.constant 0.000000e+00 : f32
    "tpu.trace_stop"() : () -> ()
    %18 = vector.broadcast %cst_17 : f32 to vector<1x8x8xf32>
    %19 = arith.cmpf ogt, %2, %18 : vector<1x8x8xf32>
    %cst_18 = arith.constant -9.000000e+15 : f32
    %20 = vector.broadcast %cst_18 : f32 to vector<1x8x8xf32>
    %21 = arith.select %19, %17, %20 : vector<1x8x8xi1>, vector<1x8x8xf32>
    %cst_19 = arith.constant dense<0xFF800000> : vector<1x8xf32>
    %22 = vector.multi_reduction <maximumf>, %21, %cst_19 [1] : vector<1x8x8xf32> to vector<1x8xf32>
    %23 = vector.shape_cast %22 : vector<1x8xf32> to vector<1x1x8xf32>
    %24 = vector.broadcast %23 : vector<1x1x8xf32> to vector<1x8x8xf32>
    %25 = arith.subf %21, %24 : vector<1x8x8xf32>
    %26 = math.exp %25 : vector<1x8x8xf32>
    %cst_20 = arith.constant dense<0.000000e+00> : vector<1x8xf32>
    %27 = vector.multi_reduction <add>, %26, %cst_20 [1] : vector<1x8x8xf32> to vector<1x8xf32>
    %28 = vector.shape_cast %27 : vector<1x8xf32> to vector<1x1x8xf32>
    %29 = tpu.reciprocal %28 {approx = true} : vector<1x1x8xf32> -> vector<1x1x8xf32>
    %30 = vector.broadcast %29 : vector<1x1x8xf32> to vector<1x8x8xf32>
    %31 = arith.mulf %26, %30 : vector<1x8x8xf32>
    %32 = arith.mulf %31, %2 : vector<1x8x8xf32>
    %33 = arith.truncf %32 : vector<1x8x8xf32> to vector<1x8x8xbf16>
    "tpu.trace_start"() <{level = 10 : i32, message = "bjk,bkd->bjd"}> : () -> ()
    %cst_21 = arith.constant dense<0.000000e+00> : vector<1x8x32xf32>
    %34 = tpu.matmul %33, %14, %cst_21 {dimension_numbers = #tpu.dot_dimension_numbers<[2], [1], [1], [2], [0, 0, 0, 1, 1, 2], [0], [0]>} : vector<1x8x8xbf16>, vector<1x8x32xbf16>, vector<1x8x32xf32> -> vector<1x8x32xf32>
    "tpu.trace_stop"() : () -> ()
    %cst_22 = arith.constant 0.000000e+00 : f32
    %35 = vector.broadcast %cst_22 : f32 to vector<1x8x32xf32>
    %36 = arith.maximumf %34, %35 : vector<1x8x32xf32>
    %37 = arith.extf %0 : vector<1x8x32xbf16> to vector<1x8x32xf32>
    %38 = vector.extract_strided_slice %6 {offsets = [0, 0], sizes = [1, 32], strides = [1, 1]} : vector<1x64xf32> to vector<1x32xf32>
    %39 = vector.extract_strided_slice %6 {offsets = [0, 32], sizes = [1, 32], strides = [1, 1]} : vector<1x64xf32> to vector<1x32xf32>
    %40 = vector.shape_cast %38 : vector<1x32xf32> to vector<1x1x32xf32>
    %41 = vector.broadcast %40 : vector<1x1x32xf32> to vector<1x8x32xf32>
    %42 = arith.mulf %37, %41 : vector<1x8x32xf32>
    %43 = vector.shape_cast %39 : vector<1x32xf32> to vector<1x1x32xf32>
    %44 = vector.broadcast %43 : vector<1x1x32xf32> to vector<1x8x32xf32>
    %45 = arith.mulf %36, %44 : vector<1x8x32xf32>
    %46 = arith.addf %42, %45 : vector<1x8x32xf32>
    %cst_23 = arith.constant dense<0.000000e+00> : vector<1x8xf32>
    %47 = vector.multi_reduction <add>, %46, %cst_23 [2] : vector<1x8x32xf32> to vector<1x8xf32>
    %48 = vector.shape_cast %47 : vector<1x8xf32> to vector<1x8x1xf32>
    %49 = vector.shape_cast %7 : vector<1x1xf32> to vector<1x1x1xf32>
    %50 = vector.broadcast %49 : vector<1x1x1xf32> to vector<1x8x1xf32>
    %51 = arith.addf %48, %50 : vector<1x8x1xf32>
    %52 = arith.negf %51 : vector<1x8x1xf32>
    %53 = math.exp %52 : vector<1x8x1xf32>
    %cst_24 = arith.constant 1.000000e+00 : f32
    %54 = vector.broadcast %cst_24 : f32 to vector<1x8x1xf32>
    %55 = arith.addf %54, %53 : vector<1x8x1xf32>
    %56 = arith.divf %54, %55 : vector<1x8x1xf32>
    %57 = vector.broadcast %56 : vector<1x8x1xf32> to vector<1x8x32xf32>
    %58 = arith.mulf %57, %37 : vector<1x8x32xf32>
    %cst_25 = arith.constant 1.000000e+00 : f32
    %59 = vector.broadcast %cst_25 : f32 to vector<1x8x1xf32>
    %60 = arith.subf %59, %56 : vector<1x8x1xf32>
    %61 = vector.broadcast %60 : vector<1x8x1xf32> to vector<1x8x32xf32>
    %62 = arith.mulf %61, %36 : vector<1x8x32xf32>
    %63 = arith.addf %58, %62 : vector<1x8x32xf32>
    %c0_26 = arith.constant 0 : index
    %c0_27 = arith.constant 0 : index
    %c0_28 = arith.constant 0 : index
    %64 = vector.load %arg8[%c0_26, %c0_27, %c0_28] : memref<1x8x32xf32, #tpu.memory_space<vmem>>, vector<1x8x32xf32>
    tpu.vector_store %arg8[%c0_26, %c0_27, %c0_28], %63 {strides = array<i32>} : memref<1x8x32xf32, #tpu.memory_space<vmem>>, vector<1x8x32xf32>,
    return
  }
  func.func @transform_0(%arg0: i32) -> (i32, i32, i32) {
    %c0_i32 = arith.constant 0 : i32
    %c0_i32_0 = arith.constant 0 : i32
    %c0_i32_1 = arith.constant 0 : i32
    return %arg0, %c0_i32, %c0_i32_0 : i32, i32, i32
  }
  func.func @transform_1(%arg0: i32) -> (i32, i32, i32) {
    %c0_i32 = arith.constant 0 : i32
    %c0_i32_0 = arith.constant 0 : i32
    %c0_i32_1 = arith.constant 0 : i32
    return %arg0, %c0_i32, %c0_i32_0 : i32, i32, i32
  }
  func.func @transform_2(%arg0: i32) -> (i32, i32) {
    %c0_i32 = arith.constant 0 : i32
    %c0_i32_0 = arith.constant 0 : i32
    %c0_i32_1 = arith.constant 0 : i32
    return %c0_i32, %c0_i32_0 : i32, i32
  }
  func.func @transform_3(%arg0: i32) -> (i32, i32) {
    %c0_i32 = arith.constant 0 : i32
    %c0_i32_0 = arith.constant 0 : i32
    %c0_i32_1 = arith.constant 0 : i32
    return %c0_i32, %c0_i32_0 : i32, i32
  }
  func.func @transform_4(%arg0: i32) -> (i32, i32) {
    %c0_i32 = arith.constant 0 : i32
    %c0_i32_0 = arith.constant 0 : i32
    %c0_i32_1 = arith.constant 0 : i32
    return %c0_i32, %c0_i32_0 : i32, i32
  }
  func.func @transform_5(%arg0: i32) -> (i32, i32) {
    %c0_i32 = arith.constant 0 : i32
    %c0_i32_0 = arith.constant 0 : i32
    %c0_i32_1 = arith.constant 0 : i32
    return %c0_i32, %c0_i32_0 : i32, i32
  }
  func.func @transform_6(%arg0: i32) -> (i32, i32) {
    %c0_i32 = arith.constant 0 : i32
    %c0_i32_0 = arith.constant 0 : i32
    %c0_i32_1 = arith.constant 0 : i32
    return %c0_i32, %c0_i32_0 : i32, i32
  }
  func.func @transform_7(%arg0: i32) -> (i32, i32, i32) {
    %c0_i32 = arith.constant 0 : i32
    %c0_i32_0 = arith.constant 0 : i32
    %c0_i32_1 = arith.constant 0 : i32
    return %arg0, %c0_i32, %c0_i32_0 : i32, i32, i32
  }
}

</mosaic_0001>

<llo_original>
// kernel: tpu_custom_call.1
$region0: #{tpu_custom_call.1}
  #allocation0 [shape = 'u32[]', space=smem, size = 0x4, offset = 0x4, fixed_abs, tag = 'smem constant byte address 0x4 - core index']
  #allocation1 [shape = 'u32[144,128]{1,0:T(1,128)}', space=vmem, size = 0x12000, scoped, tag = 'internal scratch']
  #allocation2 [shape = 'f32[1,1]{1,0:T(1,128)S(1)}', space=vmem, size = 0x200, scoped, tag = 'scoped memory for tpu_custom_call.1']
  %s0 = inlined_call_operand.hbm [shape: bf16[2,8,32], index: 0, kind: input, shape index: {}]
  %s1 = inlined_call_operand.hbm [shape: bf16[2,8,8], index: 1, kind: input, shape index: {}]
  %s2 = inlined_call_operand.hbm [shape: bf16[32,32], index: 2, kind: input, shape index: {}]
  %s3 = inlined_call_operand.vmem [shape: f32[1,32], index: 3, kind: input, shape index: {}]
  %s4 = inlined_call_operand.vmem [shape: bf16[32,32], index: 4, kind: input, shape index: {}]
  %s5 = inlined_call_operand.vmem [shape: f32[1,64], index: 5, kind: input, shape index: {}]
  %s6 = inlined_call_operand.<no memory space> [shape: f32[1,1], index: 6, kind: input, shape index: {}]
  %s7 = inlined_call_operand.hbm [shape: f32[2,8,32], index: 7, kind: output, shape index: {}]
  %s8 = sld [smem:[#allocation0]]
  $region73: #{tpu_custom_call.1} parent=0
    _
  %s10 = ssub.s32 1, %s8
  %s11 = scalar_select 0, %s10, %s8
  %v12 = vstv %s6
  %13 = vst [vmem:[#allocation2] sm:$0x1] %v12
  $region1: #{tpu_custom_call.1} parent=0
    #allocation3 [shape = 'u8[4096]{0}', space=vmem, size = 0x1000, scoped, tag = 'input window, operand 0']
    #allocation4 [shape = 's32[2]{0}', space=sflag, size = 0x8, scoped, tag = 'scoped memory for tpu_custom_call.1']
    #allocation5 [shape = 's32[2]{0}', space=sflag, size = 0x8, scoped, tag = 'scoped memory for tpu_custom_call.1']
    #allocation6 [shape = 'u8[4096]{0}', space=vmem, size = 0x1000, scoped, tag = 'input window, operand 1']
    #allocation7 [shape = 's32[2]{0}', space=sflag, size = 0x8, scoped, tag = 'scoped memory for tpu_custom_call.1']
    #allocation8 [shape = 'u8[8192]{0}', space=vmem, size = 0x2000, scoped, tag = 'input window, operand 2, single buffered']
    #allocation9 [shape = 'u8[8192]{0}', space=vmem, size = 0x2000, scoped, tag = 'output window, operand 0']
    %14 = vsyncpa [#allocation4], 0
    %s15 = scalar_lea.sflag [#allocation4], 1
    %16 = vsyncpa %s15, 0
    %17 = vsyncpa [#allocation7], 0
    %s18 = scalar_lea.sflag [#allocation7], 1
    %19 = vsyncpa %s18, 0
    %20 = vsyncpa [#allocation5], 0
    %s21 = scalar_lea.sflag [#allocation5], 1
    %22 = vsyncpa %s21, 0
    loop: start=0, step=1, limit=4
    $region2: #{tpu_custom_call.1} parent=1 // loop_pre_header
      _
    $region3: #{tpu_custom_call.1} parent=1 // loop_header
      %s24 = sphi 0, %s28
      %p25 = scmp.ge.s32.totalorder %s24, 4
      %s34 = sphi 0, %s36
      %s37 = sphi 0, %s34
      %s38 = sphi 0, %s37
      %s54 = sphi 0, %s38
      %s60 = sphi 0, %s62
      %s63 = sphi 0, %s60
      %s64 = sphi 0, %s63
      %s80 = sphi 0, %s64
      %s84 = sphi 0, %s84
      %s86 = sphi 0, %s84
      %s87 = sphi 0, %s86
      %s101 = sphi 0, %s87
      %s105 = sphi 0, %s105
      %s107 = sphi 0, %s105
      %s108 = sphi 0, %s107
      %s122 = sphi 0, %s108
      %s126 = sphi 0, %s126
      %s128 = sphi 0, %s126
      %s129 = sphi 0, %s128
      %s143 = sphi 0, %s129
      %s147 = sphi 0, %s147
      %s149 = sphi 0, %s147
      %s150 = sphi 0, %s149
      %s164 = sphi 0, %s150
      %s168 = sphi 0, %s168
      %s170 = sphi 0, %s168
      %s171 = sphi 0, %s170
      %s185 = sphi 0, %s171
      %s191 = sphi 0, %s193
      %s194 = sphi 0, %s191
      %s195 = sphi 0, %s194
      %s211 = sphi 0, %s195
    $region4: #{tpu_custom_call.1} parent=1 // loop_header_branch
      %27 = sbr.rel (%p25) target = $region8
    $region5: #{tpu_custom_call.1} parent=1 // loop_body
      %s29 = ssub.s32 %s24, 1
      %s30 = ssub.s32 %s24, 2
      %s31 = sadd.s32 %s24, 1
      %s32 = ssub.s32 %s24, %s31
      %p33 = scmp.eq.s32.totalorder %s32, 0
      %s35 = sadd.s32 %s34, 1
      %s36 = scalar_select %p33, %s34, %s35
      %p39 = pneg %p33
      %p40 = scmp.eq.s32.totalorder %s24, 1
      %p41 = por %p39, %p40
      %p42 = scmp.ne.s32.totalorder %s34, %s37
      %p43 = scmp.eq.s32.totalorder %s24, 0
      %p44 = por %p42, %p43
      %p45 = scmp.ne.s32.totalorder %s34, %s37
      %p46 = scmp.eq.s32.totalorder %s29, 1
      %p47 = por %p45, %p46
      %p48 = scmp.ne.s32.totalorder %s37, %s38
      %p49 = scmp.eq.s32.totalorder %s29, 0
      %p50 = por %p48, %p49
      %p51 = scmp.ne.s32.totalorder %s37, %s38
      %p52 = scmp.eq.s32.totalorder %s30, 1
      %p53 = por %p51, %p52
      %p55 = scmp.ne.s32.totalorder %s38, %s54
      %p56 = scmp.eq.s32.totalorder %s30, 0
      %p57 = por %p55, %p56
      %s58 = ssub.s32 %s24, %s31
      %p59 = scmp.eq.s32.totalorder %s58, 0
      %s61 = sadd.s32 %s60, 1
      %s62 = scalar_select %p59, %s60, %s61
      %p65 = pneg %p59
      %p66 = scmp.eq.s32.totalorder %s24, 1
      %p67 = por %p65, %p66
      %p68 = scmp.ne.s32.totalorder %s60, %s63
      %p69 = scmp.eq.s32.totalorder %s24, 0
      %p70 = por %p68, %p69
      %p71 = scmp.ne.s32.totalorder %s60, %s63
      %p72 = scmp.eq.s32.totalorder %s29, 1
      %p73 = por %p71, %p72
      %p74 = scmp.ne.s32.totalorder %s63, %s64
      %p75 = scmp.eq.s32.totalorder %s29, 0
      %p76 = por %p74, %p75
      %p77 = scmp.ne.s32.totalorder %s63, %s64
      %p78 = scmp.eq.s32.totalorder %s30, 1
      %p79 = por %p77, %p78
      %p81 = scmp.ne.s32.totalorder %s64, %s80
      %p82 = scmp.eq.s32.totalorder %s30, 0
      %p83 = por %p81, %p82
      %s85 = sadd.s32 %s84, 1
      %p88 = scmp.eq.s32.totalorder %s24, 1
      %p89 = scmp.ne.s32.totalorder %s84, %s86
      %p90 = scmp.eq.s32.totalorder %s24, 0
      %p91 = por %p89, %p90
      %p92 = scmp.ne.s32.totalorder %s84, %s86
      %p93 = scmp.eq.s32.totalorder %s29, 1
      %p94 = por %p92, %p93
      %p95 = scmp.ne.s32.totalorder %s86, %s87
      %p96 = scmp.eq.s32.totalorder %s29, 0
      %p97 = por %p95, %p96
      %p98 = scmp.ne.s32.totalorder %s86, %s87
      %p99 = scmp.eq.s32.totalorder %s30, 1
      %p100 = por %p98, %p99
      %p102 = scmp.ne.s32.totalorder %s87, %s101
      %p103 = scmp.eq.s32.totalorder %s30, 0
      %p104 = por %p102, %p103
      %s106 = sadd.s32 %s105, 1
      %p109 = scmp.eq.s32.totalorder %s24, 1
      %p110 = scmp.ne.s32.totalorder %s105, %s107
      %p111 = scmp.eq.s32.totalorder %s24, 0
      %p112 = por %p110, %p111
      %p113 = scmp.ne.s32.totalorder %s105, %s107
      %p114 = scmp.eq.s32.totalorder %s29, 1
      %p115 = por %p113, %p114
      %p116 = scmp.ne.s32.totalorder %s107, %s108
      %p117 = scmp.eq.s32.totalorder %s29, 0
      %p118 = por %p116, %p117
      %p119 = scmp.ne.s32.totalorder %s107, %s108
      %p120 = scmp.eq.s32.totalorder %s30, 1
      %p121 = por %p119, %p120
      %p123 = scmp.ne.s32.totalorder %s108, %s122
      %p124 = scmp.eq.s32.totalorder %s30, 0
      %p125 = por %p123, %p124
      %s127 = sadd.s32 %s126, 1
      %p130 = scmp.eq.s32.totalorder %s24, 1
      %p131 = scmp.ne.s32.totalorder %s126, %s128
      %p132 = scmp.eq.s32.totalorder %s24, 0
      %p133 = por %p131, %p132
      %p134 = scmp.ne.s32.totalorder %s126, %s128
      %p135 = scmp.eq.s32.totalorder %s29, 1
      %p136 = por %p134, %p135
      %p137 = scmp.ne.s32.totalorder %s128, %s129
      %p138 = scmp.eq.s32.totalorder %s29, 0
      %p139 = por %p137, %p138
      %p140 = scmp.ne.s32.totalorder %s128, %s129
      %p141 = scmp.eq.s32.totalorder %s30, 1
      %p142 = por %p140, %p141
      %p144 = scmp.ne.s32.totalorder %s129, %s143
      %p145 = scmp.eq.s32.totalorder %s30, 0
      %p146 = por %p144, %p145
      %s148 = sadd.s32 %s147, 1
      %p151 = scmp.eq.s32.totalorder %s24, 1
      %p152 = scmp.ne.s32.totalorder %s147, %s149
      %p153 = scmp.eq.s32.totalorder %s24, 0
      %p154 = por %p152, %p153
      %p155 = scmp.ne.s32.totalorder %s147, %s149
      %p156 = scmp.eq.s32.totalorder %s29, 1
      %p157 = por %p155, %p156
      %p158 = scmp.ne.s32.totalorder %s149, %s150
      %p159 = scmp.eq.s32.totalorder %s29, 0
      %p160 = por %p158, %p159
      %p161 = scmp.ne.s32.totalorder %s149, %s150
      %p162 = scmp.eq.s32.totalorder %s30, 1
      %p163 = por %p161, %p162
      %p165 = scmp.ne.s32.totalorder %s150, %s164
      %p166 = scmp.eq.s32.totalorder %s30, 0
      %p167 = por %p165, %p166
      %s169 = sadd.s32 %s168, 1
      %p172 = scmp.eq.s32.totalorder %s24, 1
      %p173 = scmp.ne.s32.totalorder %s168, %s170
      %p174 = scmp.eq.s32.totalorder %s24, 0
      %p175 = por %p173, %p174
      %p176 = scmp.ne.s32.totalorder %s168, %s170
      %p177 = scmp.eq.s32.totalorder %s29, 1
      %p178 = por %p176, %p177
      %p179 = scmp.ne.s32.totalorder %s170, %s171
      %p180 = scmp.eq.s32.totalorder %s29, 0
      %p181 = por %p179, %p180
      %p182 = scmp.ne.s32.totalorder %s170, %s171
      %p183 = scmp.eq.s32.totalorder %s30, 1
      %p184 = por %p182, %p183
      %p186 = scmp.ne.s32.totalorder %s171, %s185
      %p187 = scmp.eq.s32.totalorder %s30, 0
      %p188 = por %p186, %p187
      %s189 = ssub.s32 %s24, %s31
      %p190 = scmp.eq.s32.totalorder %s189, 0
      %s192 = sadd.s32 %s191, 1
      %s193 = scalar_select %p190, %s191, %s192
      %p196 = pneg %p190
      %p197 = scmp.eq.s32.totalorder %s24, 1
      %p198 = por %p196, %p197
      %p199 = scmp.ne.s32.totalorder %s191, %s194
      %p200 = scmp.eq.s32.totalorder %s24, 0
      %p201 = por %p199, %p200
      %p202 = scmp.ne.s32.totalorder %s191, %s194
      %p203 = scmp.eq.s32.totalorder %s29, 1
      %p204 = por %p202, %p203
      %p205 = scmp.ne.s32.totalorder %s194, %s195
      %p206 = scmp.eq.s32.totalorder %s29, 0
      %p207 = por %p205, %p206
      %p208 = scmp.ne.s32.totalorder %s194, %s195
      %p209 = scmp.eq.s32.totalorder %s30, 1
      %p210 = por %p208, %p209
      %p212 = scmp.ne.s32.totalorder %s195, %s211
      %p213 = scmp.eq.s32.totalorder %s30, 0
      %p214 = por %p212, %p213
      %p215 = scmp.le.s32.totalorder 1, %s24
      %p216 = scmp.lt.s32.totalorder %s24, 3
      %p217 = pnand %p215, %p216
      %p218 = pneg %p217
      // Predicated region
      $region9: #{tpu_custom_call.1} parent=5 // pred_check
        _
      $region10: #{tpu_custom_call.1} parent=5 // pred_check_branch
        %220 = sbr.rel (%p217) target = $region12
      $region11: #{tpu_custom_call.1} parent=5 // pred_region
        %s221 = ssub.s32 %s24, 1
        // Predicated region
        $region13: #{tpu_custom_call.1} parent=11 // pred_check
          %p222 = pneg %p97
        $region14: #{tpu_custom_call.1} parent=11 // pred_check_branch
          %224 = sbr.rel (%p222) target = $region16
        $region15: #{tpu_custom_call.1} parent=11 // pred_region
          %s226 = ssub.s32 256, 256
          %227 = vsyncadd [#allocation7], %s226
          %s228 = sshll.u32 [#allocation8], 4
          %s229 = int_to_ptr.vmem [resolvable:$true] %s228
          %234 = dma.hbm_to_vmem [thread:$0]  %s2, 256, %s229, [#allocation7], 64, 64, 4
        $region16: #{tpu_custom_call.1} parent=11 // pred_fallthru
          _
        // Predicated region
        $region17: #{tpu_custom_call.1} parent=11 // pred_check
          %p235 = pneg %p118
        $region18: #{tpu_custom_call.1} parent=11 // pred_check_branch
          %237 = sbr.rel (%p235) target = $region20
        $region19: #{tpu_custom_call.1} parent=11 // pred_region
          _
        $region20: #{tpu_custom_call.1} parent=11 // pred_fallthru
          _
        // Predicated region
        $region21: #{tpu_custom_call.1} parent=11 // pred_check
          %p238 = pneg %p139
        $region22: #{tpu_custom_call.1} parent=11 // pred_check_branch
          %240 = sbr.rel (%p238) target = $region24
        $region23: #{tpu_custom_call.1} parent=11 // pred_region
          _
        $region24: #{tpu_custom_call.1} parent=11 // pred_fallthru
          _
        // Predicated region
        $region25: #{tpu_custom_call.1} parent=11 // pred_check
          %p241 = pneg %p160
        $region26: #{tpu_custom_call.1} parent=11 // pred_check_branch
          %243 = sbr.rel (%p241) target = $region28
        $region27: #{tpu_custom_call.1} parent=11 // pred_region
          _
        $region28: #{tpu_custom_call.1} parent=11 // pred_fallthru
          _
        // Predicated region
        $region29: #{tpu_custom_call.1} parent=11 // pred_check
          %p244 = pneg %p181
        $region30: #{tpu_custom_call.1} parent=11 // pred_check_branch
          %246 = sbr.rel (%p244) target = $region32
        $region31: #{tpu_custom_call.1} parent=11 // pred_region
          _
        $region32: #{tpu_custom_call.1} parent=11 // pred_fallthru
          _
      $region12: #{tpu_custom_call.1} parent=5 // pred_fallthru
        _
      %p247 = scmp.lt.s32.totalorder %s24, 2
      // Predicated region
      $region33: #{tpu_custom_call.1} parent=5 // pred_check
        %p248 = pneg %p247
      $region34: #{tpu_custom_call.1} parent=5 // pred_check_branch
        %250 = sbr.rel (%p248) target = $region36
      $region35: #{tpu_custom_call.1} parent=5 // pred_region
        // Predicated region
        $region37: #{tpu_custom_call.1} parent=35 // pred_check
          %p251 = pneg %p44
        $region38: #{tpu_custom_call.1} parent=35 // pred_check_branch
          %253 = sbr.rel (%p251) target = $region40
        $region39: #{tpu_custom_call.1} parent=35 // pred_region
          %s254 = sand.u32 %s34, 1
          %s255 = scalar_lea.sflag [#allocation4], %s254
          %s256 = sand.u32 %s34, 1
          %s257 = smul.addr %s256, 4
          %s258 = scalar_lea.vmem [#allocation3], %s257
          %s260 = ssub.s32 64, 64
          %261 = vsyncadd %s255, %s260
          %s262 = smul.addr %s24, 64
          %s263 = scalar_lea.hbm %s0, %s262
          %s265 = sshll.u32 %s258, 4
          %s266 = int_to_ptr.vmem [resolvable:$true] %s265
          %268 = dma.hbm_to_vmem [thread:$0]  %s263, 64, %s266, %s255
        $region40: #{tpu_custom_call.1} parent=35 // pred_fallthru
          _
        // Predicated region
        $region41: #{tpu_custom_call.1} parent=35 // pred_check
          %p269 = pneg %p70
        $region42: #{tpu_custom_call.1} parent=35 // pred_check_branch
          %271 = sbr.rel (%p269) target = $region44
        $region43: #{tpu_custom_call.1} parent=35 // pred_region
          %s272 = sand.u32 %s24, 1
          %s273 = scalar_lea.sflag [#allocation7], %s272
          %s274 = sand.u32 %s60, 1
          %s275 = smul.addr %s274, 4
          %s276 = scalar_lea.vmem [#allocation6], %s275
          %s278 = ssub.s32 64, 64
          %279 = vsyncadd %s273, %s278
          %s280 = smul.addr %s24, 64
          %s281 = scalar_lea.hbm %s1, %s280
          %s283 = sshll.u32 %s276, 4
          %s284 = int_to_ptr.vmem [resolvable:$true] %s283
          %286 = dma.hbm_to_vmem [thread:$0]  %s281, 64, %s284, %s273
        $region44: #{tpu_custom_call.1} parent=35 // pred_fallthru
          _
      $region36: #{tpu_custom_call.1} parent=5 // pred_fallthru
        _
      %p287 = scmp.le.s32.totalorder 1, %s24
      %p288 = scmp.lt.s32.totalorder %s24, 3
      %p289 = pnand %p287, %p288
      %p290 = pneg %p289
      // Predicated region
      $region45: #{tpu_custom_call.1} parent=5 // pred_check
        _
      $region46: #{tpu_custom_call.1} parent=5 // pred_check_branch
        %292 = sbr.rel (%p289) target = $region48
      $region47: #{tpu_custom_call.1} parent=5 // pred_region
        %s293 = ssub.s32 %s24, 1
        %s294 = sand.u32 %s37, 1
        %s295 = scalar_lea.sflag [#allocation4], %s294
        %s296 = sand.u32 %s37, 1
        %s297 = smul.addr %s296, 4
        %s298 = scalar_lea.vmem [#allocation3], %s297
        // Predicated region
        $region49: #{tpu_custom_call.1} parent=47 // pred_check
          %p299 = pneg %p50
        $region50: #{tpu_custom_call.1} parent=47 // pred_check_branch
          %301 = sbr.rel (%p299) target = $region52
        $region51: #{tpu_custom_call.1} parent=47 // pred_region
          %302 = dma.done %s295, 64
        $region52: #{tpu_custom_call.1} parent=47 // pred_fallthru
          _
        %s303 = sand.u32 %s29, 1
        %s304 = scalar_lea.sflag [#allocation7], %s303
        %s305 = sand.u32 %s63, 1
        %s306 = smul.addr %s305, 4
        %s307 = scalar_lea.vmem [#allocation6], %s306
        // Predicated region
        $region53: #{tpu_custom_call.1} parent=47 // pred_check
          %p308 = pneg %p76
        $region54: #{tpu_custom_call.1} parent=47 // pred_check_branch
          %310 = sbr.rel (%p308) target = $region56
        $region55: #{tpu_custom_call.1} parent=47 // pred_region
          %311 = dma.done %s304, 64
        $region56: #{tpu_custom_call.1} parent=47 // pred_fallthru
          _
        // Predicated region
        $region57: #{tpu_custom_call.1} parent=47 // pred_check
          %p312 = pneg %p97
        $region58: #{tpu_custom_call.1} parent=47 // pred_check_branch
          %314 = sbr.rel (%p312) target = $region60
        $region59: #{tpu_custom_call.1} parent=47 // pred_region
          %315 = dma.done [#allocation7], 256
        $region60: #{tpu_custom_call.1} parent=47 // pred_fallthru
          _
        %s316 = sand.u32 %s37, 1
        %s317 = scalar_lea.sflag [#allocation4], %s316
        %s318 = sand.u32 %s37, 1
        %s319 = smul.addr %s318, 4
        %s320 = scalar_lea.vmem [#allocation3], %s319
        %p321 = pneg %p50
        %p322 = pneg %p47
        %s323 = sand.u32 %s29, 1
        %s324 = scalar_lea.sflag [#allocation7], %s323
        %s325 = sand.u32 %s63, 1
        %s326 = smul.addr %s325, 4
        %s327 = scalar_lea.vmem [#allocation6], %s326
        %p328 = pneg %p76
        %p329 = pneg %p73
        %p330 = pneg %p97
        %p331 = pneg %p94
        %p332 = pneg %p118
        %p333 = pneg %p115
        %p334 = pneg %p139
        %p335 = pneg %p136
        %p336 = pneg %p160
        %p337 = pneg %p157
        %p338 = pneg %p181
        %p339 = pneg %p178
        %p340 = pneg %p207
        %p341 = pneg %p204
        %s342 = sand.u32 %s194, 1
        %s343 = scalar_lea.sflag [#allocation5], %s342
        %s344 = sand.u32 %s194, 1
        %s345 = smul.addr %s344, 8
        %s346 = scalar_lea.vmem [#allocation9], %s345
        %v348 = vld [vmem:[%s298] sm:$0xf]
        %v349 = vld [vmem:[%s307] sm:$0xf]
        %v350 = vunpack.c.l.bf16 %v349
        %v351 = vld [vmem:[#allocation8] sm:$0xf]
        %v352 = vld [vmem:[#allocation8 + $0x4] sm:$0xf]
        %v353 = vld [vmem:[#allocation8 + $0x8] sm:$0xf]
        %v354 = vld [vmem:[#allocation8 + $0xc] sm:$0xf]
        %v355 = vld [vmem:[%s3] sm:$0x1]
        %v356 = vld [vmem:[%s4] sm:$0xf]
        %v357 = vld [vmem:[%s4 + $0x4] sm:$0xf]
        %v358 = vld [vmem:[%s4 + $0x8] sm:$0xf]
        %v359 = vld [vmem:[%s4 + $0xc] sm:$0xf]
        %v360 = vld [vmem:[%s5] sm:$0x1]
        %v361 = vld [vmem:[#allocation2] sm:$0x1]
        %v363 = vlaneseq
        %v364 = vshrl.u32 %v363, 7
        %v365 = vsub.s32 0, %v364
        %v366 = vrot.slane %v355, %v365
        %v372 = vunpack.c.l.b16 %v351
        %v373 = vunpack.c.l.b16 %v352
        %v374 = vunpack.c.l.b16 %v353
        %v375 = vunpack.c.l.b16 %v354
        %v376 = vpack.c.b16 %v373, %v372
        %v377 = vpack.c.b16 %v375, %v374
        %vm378 = vcmask 261120
        %v380 = vsel %vm378, %v348, 0
        %v383 = vsel %vm378, %v376, 0
        %v386 = vsel %vm378, %v377, 0
        %388 = vmatprep.subr.bf16.mxu0 0
        %389 = vmatpush1.bf16.xpose.msra.mxu0 %v383
        %390 = vmatprep.subr.bf16.mxu0 0
        %391 = vmatpush1.bf16.xpose.msra.mxu0 %v386
        %392 = vmatprep.subr.bf16.mxu0 0
        %393 = vmatpush1.bf16.xpose.msra.mxu0 0
        %394 = vmatprep.subr.bf16.mxu0 0
        %395 = vmatpush1.bf16.xpose.msra.mxu0 0
        %396 = vmatprep.subr.bf16.mxu0 0
        %397 = vmatpush1.bf16.xpose.msra.mxu0 0
        %398 = vmatprep.subr.bf16.mxu0 0
        %399 = vmatpush1.bf16.xpose.msra.mxu0 0
        %400 = vmatprep.subr.bf16.mxu0 0
        %401 = vmatpush1.bf16.xpose.msra.mxu0 0
        %402 = vmatprep.subr.bf16.mxu0 0
        %403 = vmatpush1.bf16.xpose.msra.mxu0 0
        %404 = vmatprep.subr.bf16.mxu0 0
        %405 = vmatpush1.bf16.xpose.msra.mxu0 0
        %406 = vmatprep.subr.bf16.mxu0 0
        %407 = vmatpush1.bf16.xpose.msra.mxu0 0
        %408 = vmatprep.subr.bf16.mxu0 0
        %409 = vmatpush1.bf16.xpose.msra.mxu0 0
        %410 = vmatprep.subr.bf16.mxu0 0
        %411 = vmatpush1.bf16.xpose.msra.mxu0 0
        %412 = vmatprep.subr.bf16.mxu0 0
        %413 = vmatpush1.bf16.xpose.msra.mxu0 0
        %414 = vmatprep.subr.bf16.mxu0 0
        %415 = vmatpush1.bf16.xpose.msra.mxu0 0
        %416 = vmatprep.subr.bf16.mxu0 0
        %417 = vmatpush1.bf16.xpose.msra.mxu0 0
        %418 = vmatprep.subr.bf16.mxu0 0
        %419 = vmatpush1.bf16.xpose.msra.mxu0 0
        %420 = vmatprep.mubr.bf16.mxu0 0
        %421 = vmatmul.mubr.bf16.gmra.mrb[0].mxu0 %v380
        %v422 = vpop.f32.mrb[0].mxu0
        %v423 = vadd.f32 %v366, %v422
        %v424 = vpop.f32.mrb[0].mxu0
        %v425 = vpop.f32.mrb[0].mxu0
        %v426 = vpop.f32.mrb[0].mxu0
        %427 = vdwg.mxu0
        %v428 = vpack.c.bf16 %v423, %v423
        %v433 = vunpack.c.l.b16 %v356
        %v434 = vunpack.c.l.b16 %v357
        %v435 = vunpack.c.l.b16 %v358
        %v436 = vunpack.c.l.b16 %v359
        %v437 = vpack.c.b16 %v434, %v433
        %v438 = vpack.c.b16 %v436, %v435
        %v442 = vsel %vm378, %v428, 0
        %444 = vmatprep.subr.bf16.mxu0 0
        %445 = vmatpush1.bf16.msra.mxu0 %v437
        %446 = vmatprep.subr.bf16.mxu0 0
        %447 = vmatpush1.bf16.msra.mxu0 %v438
        %448 = vmatprep.subr.bf16.mxu0 0
        %449 = vmatpush1.bf16.msra.mxu0 0
        %450 = vmatprep.subr.bf16.mxu0 0
        %451 = vmatpush1.bf16.msra.mxu0 0
        %452 = vmatprep.subr.bf16.mxu0 0
        %453 = vmatpush1.bf16.msra.mxu0 0
        %454 = vmatprep.subr.bf16.mxu0 0
        %455 = vmatpush1.bf16.msra.mxu0 0
        %456 = vmatprep.subr.bf16.mxu0 0
        %457 = vmatpush1.bf16.msra.mxu0 0
        %458 = vmatprep.subr.bf16.mxu0 0
        %459 = vmatpush1.bf16.msra.mxu0 0
        %460 = vmatprep.subr.bf16.mxu0 0
        %461 = vmatpush1.bf16.msra.mxu0 0
        %462 = vmatprep.subr.bf16.mxu0 0
        %463 = vmatpush1.bf16.msra.mxu0 0
        %464 = vmatprep.subr.bf16.mxu0 0
        %465 = vmatpush1.bf16.msra.mxu0 0
        %466 = vmatprep.subr.bf16.mxu0 0
        %467 = vmatpush1.bf16.msra.mxu0 0
        %468 = vmatprep.subr.bf16.mxu0 0
        %469 = vmatpush1.bf16.msra.mxu0 0
        %470 = vmatprep.subr.bf16.mxu0 0
        %471 = vmatpush1.bf16.msra.mxu0 0
        %472 = vmatprep.subr.bf16.mxu0 0
        %473 = vmatpush1.bf16.msra.mxu0 0
        %474 = vmatprep.subr.bf16.mxu0 0
        %475 = vmatpush1.bf16.msra.mxu0 0
        %476 = vmatprep.mubr.bf16.mxu0 0
        %477 = vmatmul.mubr.bf16.gmra.mrb[0].mxu0 %v442
        %v478 = vpop.f32.mrb[0].mxu0
        %v479 = vadd.f32 0.0, %v478
        %v480 = vpop.f32.mrb[0].mxu0
        %v481 = vpop.f32.mrb[0].mxu0
        %v482 = vpop.f32.mrb[0].mxu0
        %483 = vdwg.mxu0
        %v484 = vpack.c.bf16 %v479, %v479
        %v486 = vsel %vm378, %v484, 0
        %488 = vmatprep.subr.bf16.mxu0 0
        %489 = vmatpush1.bf16.xpose.msra.mxu0 %v442
        %490 = vmatprep.subr.bf16.mxu0 0
        %491 = vmatpush1.bf16.xpose.msra.mxu0 0
        %492 = vmatprep.subr.bf16.mxu0 0
        %493 = vmatpush1.bf16.xpose.msra.mxu0 0
        %494 = vmatprep.subr.bf16.mxu0 0
        %495 = vmatpush1.bf16.xpose.msra.mxu0 0
        %496 = vmatprep.subr.bf16.mxu0 0
        %497 = vmatpush1.bf16.xpose.msra.mxu0 0
        %498 = vmatprep.subr.bf16.mxu0 0
        %499 = vmatpush1.bf16.xpose.msra.mxu0 0
        %500 = vmatprep.subr.bf16.mxu0 0
        %501 = vmatpush1.bf16.xpose.msra.mxu0 0
        %502 = vmatprep.subr.bf16.mxu0 0
        %503 = vmatpush1.bf16.xpose.msra.mxu0 0
        %504 = vmatprep.subr.bf16.mxu0 0
        %505 = vmatpush1.bf16.xpose.msra.mxu0 0
        %506 = vmatprep.subr.bf16.mxu0 0
        %507 = vmatpush1.bf16.xpose.msra.mxu0 0
        %508 = vmatprep.subr.bf16.mxu0 0
        %509 = vmatpush1.bf16.xpose.msra.mxu0 0
        %510 = vmatprep.subr.bf16.mxu0 0
        %511 = vmatpush1.bf16.xpose.msra.mxu0 0
        %512 = vmatprep.subr.bf16.mxu0 0
        %513 = vmatpush1.bf16.xpose.msra.mxu0 0
        %514 = vmatprep.subr.bf16.mxu0 0
        %515 = vmatpush1.bf16.xpose.msra.mxu0 0
        %516 = vmatprep.subr.bf16.mxu0 0
        %517 = vmatpush1.bf16.xpose.msra.mxu0 0
        %518 = vmatprep.subr.bf16.mxu0 0
        %519 = vmatpush1.bf16.xpose.msra.mxu0 0
        %520 = vmatprep.mubr.bf16.mxu0 0
        %521 = vmatmul.mubr.bf16.gmra.mrb[0].mxu0 %v486
        %v522 = vpop.f32.mrb[0].mxu0
        %v523 = vadd.f32 0.0, %v522
        %v524 = vpop.f32.mrb[0].mxu0
        %v525 = vpop.f32.mrb[0].mxu0
        %v526 = vpop.f32.mrb[0].mxu0
        %527 = vdwg.mxu0
        %vm528 = vcmp.gt.f32.partialorder %v350, 0.0
        %v529 = vsel %vm528, %v523, -9e+15
        %vm530 = vcmask 64512
        %v531 = vsel %vm530, %v529, -inf
        %v532 = vrot.slane %v531, 4
        %v533 = vmax.f32 %v531, %v532
        %v534 = vrot.slane %v533, 2
        %v535 = vmax.f32 %v533, %v534
        %v536 = vrot.slane %v535, 1
        %v537 = vmax.f32 %v535, %v536
        %v538 = vsub.f32 %v529, %v537
        %v539 = vmul.f32 %v538, 1.442695
        %v540 = vpow.pop %v539
        %v541 = vsel %vm530, %v540, 0.0
        %v542 = vrot.slane %v541, 4
        %v543 = vadd.f32 %v541, %v542
        %v544 = vrot.slane %v543, 2
        %v545 = vadd.f32 %v543, %v544
        %v546 = vrot.slane %v545, 1
        %v547 = vadd.f32 %v545, %v546
        %v548 = vrcp.pop %v547
        %v549 = vmul.f32 %v540, %v548
        %v550 = vmul.f32 %v549, %v350
        %v551 = vpack.c.bf16 %v550, %v550
        %v553 = vsel %vm530, %v551, 0
        %vm555 = vcmask 1043456
        %v556 = vsel %vm555, %v428, 0
        %558 = vmatprep.subr.bf16.mxu0 0
        %559 = vmatpush1.bf16.msra.mxu0 %v556
        %560 = vmatprep.subr.bf16.mxu0 0
        %561 = vmatpush1.bf16.msra.mxu0 0
        %562 = vmatprep.subr.bf16.mxu0 0
        %563 = vmatpush1.bf16.msra.mxu0 0
        %564 = vmatprep.subr.bf16.mxu0 0
        %565 = vmatpush1.bf16.msra.mxu0 0
        %566 = vmatprep.subr.bf16.mxu0 0
        %567 = vmatpush1.bf16.msra.mxu0 0
        %568 = vmatprep.subr.bf16.mxu0 0
        %569 = vmatpush1.bf16.msra.mxu0 0
        %570 = vmatprep.subr.bf16.mxu0 0
        %571 = vmatpush1.bf16.msra.mxu0 0
        %572 = vmatprep.subr.bf16.mxu0 0
        %573 = vmatpush1.bf16.msra.mxu0 0
        %574 = vmatprep.subr.bf16.mxu0 0
        %575 = vmatpush1.bf16.msra.mxu0 0
        %576 = vmatprep.subr.bf16.mxu0 0
        %577 = vmatpush1.bf16.msra.mxu0 0
        %578 = vmatprep.subr.bf16.mxu0 0
        %579 = vmatpush1.bf16.msra.mxu0 0
        %580 = vmatprep.subr.bf16.mxu0 0
        %581 = vmatpush1.bf16.msra.mxu0 0
        %582 = vmatprep.subr.bf16.mxu0 0
        %583 = vmatpush1.bf16.msra.mxu0 0
        %584 = vmatprep.subr.bf16.mxu0 0
        %585 = vmatpush1.bf16.msra.mxu0 0
        %586 = vmatprep.subr.bf16.mxu0 0
        %587 = vmatpush1.bf16.msra.mxu0 0
        %588 = vmatprep.subr.bf16.mxu0 0
        %589 = vmatpush1.bf16.msra.mxu0 0
        %590 = vmatprep.mubr.bf16.mxu0 0
        %591 = vmatmul.mubr.bf16.gmra.mrb[0].mxu0 %v553
        %v592 = vpop.f32.mrb[0].mxu0
        %v593 = vadd.f32 0.0, %v592
        %v594 = vpop.f32.mrb[0].mxu0
        %v595 = vpop.f32.mrb[0].mxu0
        %v596 = vpop.f32.mrb[0].mxu0
        %597 = vdwg.mxu0
        %v598 = vmax.f32 %v593, 0.0
        %v599 = vunpack.c.l.bf16 %v348
        %v601 = vlaneseq
        %v602 = vshrl.u32 %v601, 7
        %v603 = vsub.s32 0, %v602
        %v604 = vrot.slane %v360, %v603
        %v606 = vmul.f32 %v599, %v604
        %607 = vrot.lane.b32.xlu0 %v604, 96
        %v608 = vpop.permute.xlu0 %607
        %v610 = vmul.f32 %v598, %v608
        %v611 = vadd.f32 %v606, %v610
        %v612 = vsel %vm378, %v611, 0.0
        %613 = vadd.xlane.f32.xlu0 %v612
        %v614 = vpop.xlane.xlu0 %613
        %v616 = vlaneseq
        %v617 = vshrl.u32 %v616, 7
        %v618 = vsub.s32 0, %v617
        %v619 = vrot.slane %v361, %v618
        %v621 = vadd.f32 %v614, %v619
        %v622 = vxor.u32 %v621, 2147483648
        %v623 = vmul.f32 %v622, 1.442695
        %v624 = vpow.pop %v623
        %v625 = vadd.f32 %v624, 1.0
        %v626 = vrcp.pop %v625
        %v627 = vmul.f32 1.0, %v626
        %629 = vset.pattern.permute.xlu0 0
        %630 = vperm.xlu0 %629, %v627
        %v631 = vpop.permute.xlu0 %630
        %v633 = vmul.f32 %v631, %v599
        %v634 = vsub.f32 1.0, %v627
        %636 = vset.pattern.permute.xlu0 0
        %637 = vperm.xlu0 %636, %v634
        %v638 = vpop.permute.xlu0 %637
        %v640 = vmul.f32 %v638, %v598
        %v641 = vadd.f32 %v633, %v640
        %642 = vst.msk [vmem:[%s346] sm:$0xff] %vm378, %v641
        %s643 = sand.u32 %s194, 1
        %s644 = scalar_lea.sflag [#allocation5], %s643
        %s645 = sand.u32 %s194, 1
        %s646 = smul.addr %s645, 8
        %s647 = scalar_lea.vmem [#allocation9], %s646
        // Predicated region
        $region61: #{tpu_custom_call.1} parent=47 // pred_check
          %p648 = pneg %p204
        $region62: #{tpu_custom_call.1} parent=47 // pred_check_branch
          %650 = sbr.rel (%p648) target = $region64
        $region63: #{tpu_custom_call.1} parent=47 // pred_region
          %s652 = ssub.s32 128, 128
          %653 = vsyncadd %s644, %s652
          %s654 = smul.addr %s29, 128
          %s655 = scalar_lea.hbm %s7, %s654
          %s657 = sshll.u32 %s647, 4
          %s658 = int_to_ptr.vmem [resolvable:$true] %s657
          %660 = dma.vmem_to_hbm [thread:$0]  %s658, 128, %s655, %s644
        $region64: #{tpu_custom_call.1} parent=47 // pred_fallthru
          _
      $region48: #{tpu_custom_call.1} parent=5 // pred_fallthru
        _
      %p661 = scmp.le.s32.totalorder 2, %s24
      // Predicated region
      $region65: #{tpu_custom_call.1} parent=5 // pred_check
        %p662 = pneg %p661
      $region66: #{tpu_custom_call.1} parent=5 // pred_check_branch
        %664 = sbr.rel (%p662) target = $region68
      $region67: #{tpu_custom_call.1} parent=5 // pred_region
        %s665 = ssub.s32 %s24, 2
        // Predicated region
        $region69: #{tpu_custom_call.1} parent=67 // pred_check
          %p666 = pneg %p210
        $region70: #{tpu_custom_call.1} parent=67 // pred_check_branch
          %668 = sbr.rel (%p666) target = $region72
        $region71: #{tpu_custom_call.1} parent=67 // pred_region
          %s669 = sand.u32 %s195, 1
          %s670 = scalar_lea.sflag [#allocation5], %s669
          %s671 = sand.u32 %s195, 1
          %s672 = smul.addr %s671, 8
          %s673 = scalar_lea.vmem [#allocation9], %s672
          %674 = dma.done %s670, 128
        $region72: #{tpu_custom_call.1} parent=67 // pred_fallthru
          _
      $region68: #{tpu_custom_call.1} parent=5 // pred_fallthru
        _
    $region6: #{tpu_custom_call.1} parent=1 // loop_footer
      %s28 = sadd.s32 1, %s24
    $region7: #{tpu_custom_call.1} parent=1 // loop_footer_branch
      %23 = sbr.rel target = $region3
    $region8: #{tpu_custom_call.1} parent=1 // loop_exit
      _
    %675 = vsyncpa [#allocation4], 1
    %s676 = scalar_lea.sflag [#allocation4], 1
    %677 = vsyncpa %s676, 1
    %678 = vsyncpa [#allocation7], 1
    %s679 = scalar_lea.sflag [#allocation7], 1
    %680 = vsyncpa %s679, 1
    %681 = vsyncpa [#allocation5], 1
    %s682 = scalar_lea.sflag [#allocation5], 1
    %683 = vsyncpa %s682, 1

</llo_original>
